<compile_context>
chip_gen: v7x
topology: tpu7x:2x2x1
jax: 0.10.0
libtpu: 0.0.40
codegen_flags: <defaults>
</compile_context>

<pallas_src>
import functools

import jax
import jax.numpy as jnp
import numpy as np
from jax import lax
from jax.experimental import pallas as pl
from jax.experimental.pallas import tpu as pltpu


def _round_down(x, m):
    return (x // m) * m


def _ce_sums_kernel(x_ref, t_ref, w_ref, loss_ref, wsum_ref, *, ignore_label, hw):
    """Lane-wide accumulation of w[y]*nll and w[y] over valid pixels.

    x_ref:    (C, TP)  logits block (classes on sublanes, pixels on lanes)
    t_ref:    (1, TP)  int32 targets
    w_ref:    (C, 1)   per-class weights
    loss_ref: (1, TP)  f32 per-lane partial sums, resident across the pixel axis
    wsum_ref: (1, TP)  f32 per-lane partial sums, resident across the pixel axis
    """
    p = pl.program_id(1)

    @pl.when(p == 0)
    def _():
        loss_ref[...] = jnp.zeros_like(loss_ref)
        wsum_ref[...] = jnp.zeros_like(wsum_ref)

    logits = x_ref[...].astype(jnp.float32)            # (C, TP)
    tgt = t_ref[...]                                    # (1, TP) int32
    C, TP = logits.shape

    # Ragged-tail mask: the last pixel block may read past HW (unspecified
    # VMEM/HBM data).  Those lanes must contribute exactly zero to BOTH sums,
    # and garbage target values must not accidentally look valid.
    pix = p * TP + lax.broadcasted_iota(jnp.int32, (1, TP), 1)
    valid = (pix < hw) & (tgt != ignore_label)          # (1, TP)

    # numerically-stable log-sum-exp along the class (sublane) axis
    m = jnp.max(logits, axis=0, keepdims=True)                           # (1, TP)
    lse = m + jnp.log(jnp.sum(jnp.exp(logits - m), axis=0, keepdims=True))

    # gather logit / class-weight at the target class via a one-hot mask
    # NOTE: targets >= C (and != ignore_label) silently get weight 0 instead of
    # erroring like PyTorch.
    cls = lax.broadcasted_iota(jnp.int32, (C, TP), 0)
    onehot = (cls == tgt).astype(jnp.float32)                            # (C, TP)
    logit_t = jnp.sum(onehot * logits, axis=0, keepdims=True)            # (1, TP)
    wt_t = jnp.sum(onehot * w_ref[...], axis=0, keepdims=True)           # (1, TP)

    nll = lse - logit_t                                                  # (1, TP)

    # pure VPU lane-wide accumulation into the resident output blocks
    # (no per-step cross-lane reduction, no sub-lane (1,1) RMW)
    loss_ref[...] += jnp.where(valid, wt_t * nll, 0.0)
    wsum_ref[...] += jnp.where(valid, wt_t, 0.0)


@functools.partial(jax.jit, static_argnames=("ignore_label", "pixel_tile"))
def _cross_entropy_loss(score, target, class_weight, *, ignore_label, pixel_tile):
    """nn.CrossEntropyLoss(weight=class_weight, ignore_index=ignore_label,
    reduction='mean') for score (N,C,H,W), target (N,H,W)."""
    N, C, H, W = score.shape
    HW = H * W

    assert pixel_tile % 128 == 0 and pixel_tile >= 128, (
        "pixel_tile must be a positive multiple of 128 (lane-dense tiles)")

    # pure reshapes (class axis stays put; no transpose, no padding copies)
    x = score.reshape(N, C, HW)
    t = target.reshape(N, 1, HW).astype(jnp.int32)

    # Pixel tile: as large as requested, but keep the (C, tp) working set
    # (double-buffered input block + in-kernel f32 intermediates, ~8 copies)
    # comfortably inside VMEM on every generation (v7x has 64 MiB).
    vmem_budget = 24 * 1024 * 1024
    tp_cap = max(128, _round_down(vmem_budget // (8 * C * 4), 128))
    eff_tile = min(pixel_tile, tp_cap)
    tp = HW if HW <= eff_tile else eff_tile            # full dim OR 128-multiple
    num_p = (HW + tp - 1) // tp                        # last block may be ragged

    w2 = class_weight.reshape(C, 1).astype(jnp.float32)

    kernel = functools.partial(_ce_sums_kernel, ignore_label=ignore_label, hw=HW)

    cost = pl.CostEstimate(
        flops=8 * N * C * HW,
        transcendentals=N * (C + 1) * HW,
        bytes_accessed=int(x.size * x.dtype.itemsize) + int(t.size * 4)
                       + C * 4 + 2 * N * tp * 4,
    )

    # TODO(synk): when N == 1 there is no parallel grid axis for v7x megacore;
    # a coarse pixel-chunk parallel axis would be needed to use both cores.
    loss_part, wsum_part = pl.pallas_call(
        kernel,
        out_shape=(jax.ShapeDtypeStruct((N, 1, tp), jnp.float32),
                   jax.ShapeDtypeStruct((N, 1, tp), jnp.float32)),
        grid_spec=pltpu.PrefetchScalarGridSpec(
            num_scalar_prefetch=0,
            grid=(N, num_p),
            in_specs=[
                pl.BlockSpec((None, C, tp), lambda n, p: (n, 0, p)),   # logits
                pl.BlockSpec((None, 1, tp), lambda n, p: (n, 0, p)),   # targets
                pl.BlockSpec((C, 1), lambda n, p: (0, 0)),             # class w
            ],
            out_specs=[
                pl.BlockSpec((None, 1, tp), lambda n, p: (n, 0, 0)),   # sum(w*nll)
                pl.BlockSpec((None, 1, tp), lambda n, p: (n, 0, 0)),   # sum(w)
            ],
        ),
        compiler_params=pltpu.CompilerParams(
            dimension_semantics=("parallel", "arbitrary"),
            vmem_limit_bytes=48 * 1024 * 1024),
        cost_estimate=cost,
    )(x, t, w2)

    # tiny final reductions + mean over valid pixels in the wrapper
    # NOTE: if every pixel is ignore_label, this is 0/0 = NaN (matches
    # PyTorch's weighted-mean behavior closely enough).
    loss_sum = jnp.sum(loss_part)
    wsum = jnp.sum(wsum_part)
    return loss_sum / wsum


def cross_entropy_forward(score, target, *, ignore_label=255, class_weight=None,
                          balance_weights=(0.4, 1.0), sb_weights=1.0,
                          pixel_tile=8192):
    """Mirrors CrossEntropy.forward.

    `balance_weights` / `sb_weights` stand in for config.LOSS.BALANCE_WEIGHTS /
    config.LOSS.SB_WEIGHTS; wrapping a lone array into a list mirrors
    config.MODEL.NUM_OUTPUTS == 1.
    """
    # TODO(synk): config.* values come from a global config in the original repo;
    # they are exposed as plain arguments here.
    if not isinstance(score, (list, tuple)):
        score = [score]

    def _ce(s):
        C = s.shape[1]
        w = (jnp.ones((C,), jnp.float32) if class_weight is None
             else jnp.asarray(class_weight, jnp.float32))
        return _cross_entropy_loss(s, target, w,
                                   ignore_label=ignore_label,
                                   pixel_tile=pixel_tile)

    if len(balance_weights) == len(score):
        return sum(w * _ce(s) for w, s in zip(balance_weights, score))
    elif len(score) == 1:
        return sb_weights * _ce(score[0])
    else:
        raise ValueError('lengths of prediction and target are not identical!')


# ----------------------------- pure-JAX reference -----------------------------

def _ce_reference_single(score, target, ignore_label=255, class_weight=None):
    N, C, H, W = score.shape
    logp = jax.nn.log_softmax(score.astype(jnp.float32), axis=1)
    t = target.astype(jnp.int32)
    valid = t != ignore_label
    t_safe = jnp.where(valid, t, 0)
    nll = -jnp.take_along_axis(logp, t_safe[:, None, :, :], axis=1)[:, 0]
    w = (jnp.ones((C,), jnp.float32) if class_weight is None
         else jnp.asarray(class_weight, jnp.float32))
    wt = w[t_safe]
    num = jnp.sum(jnp.where(valid, wt * nll, 0.0))
    den = jnp.sum(jnp.where(valid, wt, 0.0))
    return num / den


def _reference_forward(score, target, *, ignore_label=255, class_weight=None,
                       balance_weights=(0.4, 1.0), sb_weights=1.0):
    if not isinstance(score, (list, tuple)):
        score = [score]
    if len(balance_weights) == len(score):
        return sum(w * _ce_reference_single(s, target, ignore_label, class_weight)
                   for w, s in zip(balance_weights, score))
    elif len(score) == 1:
        return sb_weights * _ce_reference_single(score[0], target,
                                                 ignore_label, class_weight)
    else:
        raise ValueError('lengths of prediction and target are not identical!')


if __name__ == "__main__":
    key = jax.random.PRNGKey(0)
    k1, k2, k3, k4 = jax.random.split(key, 4)

    # Small shapes: batch=2, num_classes=8, spatial=16x16, ignore_label=255.
    N, C, H, W = 2, 8, 16, 16
    ignore_label = 255

    score0 = jax.random.normal(k1, (N, C, H, W), dtype=jnp.float32)
    score1 = jax.random.normal(k2, (N, C, H, W), dtype=jnp.float32)
    target = jax.random.randint(k3, (N, H, W), 0, C, dtype=jnp.int32)
    ignore_mask = jax.random.uniform(k4, (N, H, W)) < 0.15
    target = jnp.where(ignore_mask, ignore_label, target)

    class_weight = jnp.linspace(0.5, 1.5, C, dtype=jnp.float32)

    # Path 1: multiple outputs, len(balance_weights) == len(score).
    loss_multi = cross_entropy_forward([score0, score1], target,
                                       ignore_label=ignore_label,
                                       class_weight=class_weight,
                                       balance_weights=(0.4, 1.0))
    loss_multi = jax.block_until_ready(loss_multi)
    ref_multi = _reference_forward([score0, score1], target,
                                   ignore_label=ignore_label,
                                   class_weight=class_weight,
                                   balance_weights=(0.4, 1.0))
    np.testing.assert_allclose(np.asarray(loss_multi), np.asarray(ref_multi),
                               rtol=1e-5, atol=1e-6)

    # Path 2: single output -> sb_weights * CE (weight=None default).
    loss_single = cross_entropy_forward(score0, target,
                                        ignore_label=ignore_label,
                                        balance_weights=(0.4, 1.0),
                                        sb_weights=0.5)
    loss_single = jax.block_until_ready(loss_single)
    ref_single = _reference_forward(score0, target, ignore_label=ignore_label,
                                    balance_weights=(0.4, 1.0), sb_weights=0.5)
    np.testing.assert_allclose(np.asarray(loss_single), np.asarray(ref_single),
                               rtol=1e-5, atol=1e-6)

    print("KERNEL_OK")
</pallas_src>

<mosaic_0001>
module attributes {stable_mosaic.version = 11 : i64} {
  func.func @_ce_sums_kernel(%arg0: i32, %arg1: i32, %arg2: memref<1x8x256xf32, #tpu.memory_space<vmem>>, %arg3: memref<1x1x256xi32, #tpu.memory_space<vmem>>, %arg4: memref<8x1xf32, #tpu.memory_space<vmem>>, %arg5: memref<1x1x256xf32, #tpu.memory_space<vmem>>, %arg6: memref<1x1x256xf32, #tpu.memory_space<vmem>>) attributes {dimension_semantics = [#tpu.dimension_semantics<parallel>, #tpu.dimension_semantics<arbitrary>], iteration_bounds = array<i64: 2, 1>, scalar_prefetch = 0 : i64, scratch_operands = 0 : i64, tpu.core_type = #tpu.core_type<tc>, window_params = [{transform_indices = @transform_0, window_bounds = array<i64: 1, 8, 256>}, {transform_indices = @transform_1, window_bounds = array<i64: 1, 1, 256>}, {pipeline_mode = #tpu.pipeline_mode<synchronous>, transform_indices = @transform_2, window_bounds = array<i64: 8, 1>}, {transform_indices = @transform_3, window_bounds = array<i64: 1, 1, 256>}, {transform_indices = @transform_4, window_bounds = array<i64: 1, 1, 256>}]} {
    %c0_i32 = arith.constant 0 : i32
    %0 = arith.cmpi eq, %arg1, %c0_i32 : i32
    %1 = arith.extui %0 : i1 to i32
    %c0_i32_0 = arith.constant 0 : i32
    %2 = arith.cmpi ne, %1, %c0_i32_0 : i32
    scf.if %2 {
      %cst_26 = arith.constant 0.000000e+00 : f32
      %56 = vector.broadcast %cst_26 : f32 to vector<1x256xf32>
      %c0_27 = arith.constant 0 : index
      %c0_28 = arith.constant 0 : index
      %c0_29 = arith.constant 0 : index
      %57 = vector.load %arg5[%c0_27, %c0_28, %c0_29] : memref<1x1x256xf32, #tpu.memory_space<vmem>>, vector<1x1x256xf32>
      %58 = vector.shape_cast %57 : vector<1x1x256xf32> to vector<1x256xf32>
      %59 = vector.shape_cast %56 : vector<1x256xf32> to vector<1x1x256xf32>
      tpu.vector_store %arg5[%c0_27, %c0_28, %c0_29], %59 {strides = array<i32>} : memref<1x1x256xf32, #tpu.memory_space<vmem>>, vector<1x1x256xf32>,
      %cst_30 = arith.constant 0.000000e+00 : f32
      %60 = vector.broadcast %cst_30 : f32 to vector<1x256xf32>
      %c0_31 = arith.constant 0 : index
      %c0_32 = arith.constant 0 : index
      %c0_33 = arith.constant 0 : index
      %61 = vector.load %arg6[%c0_31, %c0_32, %c0_33] : memref<1x1x256xf32, #tpu.memory_space<vmem>>, vector<1x1x256xf32>
      %62 = vector.shape_cast %61 : vector<1x1x256xf32> to vector<1x256xf32>
      %63 = vector.shape_cast %60 : vector<1x256xf32> to vector<1x1x256xf32>
      tpu.vector_store %arg6[%c0_31, %c0_32, %c0_33], %63 {strides = array<i32>} : memref<1x1x256xf32, #tpu.memory_space<vmem>>, vector<1x1x256xf32>,
    } else {
    }
    %c0 = arith.constant 0 : index
    %c0_1 = arith.constant 0 : index
    %c0_2 = arith.constant 0 : index
    %3 = vector.load %arg2[%c0, %c0_1, %c0_2] : memref<1x8x256xf32, #tpu.memory_space<vmem>>, vector<1x8x256xf32>
    %4 = vector.shape_cast %3 : vector<1x8x256xf32> to vector<8x256xf32>
    %c0_3 = arith.constant 0 : index
    %c0_4 = arith.constant 0 : index
    %c0_5 = arith.constant 0 : index
    %5 = vector.load %arg3[%c0_3, %c0_4, %c0_5] : memref<1x1x256xi32, #tpu.memory_space<vmem>>, vector<1x1x256xi32>
    %6 = vector.shape_cast %5 : vector<1x1x256xi32> to vector<1x256xi32>
    %c256_i32 = arith.constant 256 : i32
    %7 = arith.muli %arg1, %c256_i32 : i32
    %8 = tpu.iota {dimensions = array<i32: 1>} : vector<1x256xi32>
    %9 = vector.broadcast %7 : i32 to vector<1x256xi32>
    %10 = arith.addi %9, %8 : vector<1x256xi32>
    %c256_i32_6 = arith.constant 256 : i32
    %11 = vector.broadcast %c256_i32_6 : i32 to vector<1x256xi32>
    %12 = arith.cmpi slt, %10, %11 : vector<1x256xi32>
    %c255_i32 = arith.constant 255 : i32
    %13 = vector.broadcast %c255_i32 : i32 to vector<1x256xi32>
    %14 = arith.cmpi ne, %6, %13 : vector<1x256xi32>
    %15 = arith.andi %12, %14 : vector<1x256xi1>
    %cst = arith.constant dense<0xFF800000> : vector<256xf32>
    %16 = vector.multi_reduction <maximumf>, %4, %cst [0] : vector<8x256xf32> to vector<256xf32>
    %17 = vector.shape_cast %16 : vector<256xf32> to vector<1x256xf32>
    %18 = vector.broadcast %17 : vector<1x256xf32> to vector<8x256xf32>
    %19 = arith.subf %4, %18 : vector<8x256xf32>
    %20 = math.exp %19 : vector<8x256xf32>
    %cst_7 = arith.constant dense<0.000000e+00> : vector<256xf32>
    %21 = vector.multi_reduction <add>, %20, %cst_7 [0] : vector<8x256xf32> to vector<256xf32>
    %22 = vector.shape_cast %21 : vector<256xf32> to vector<1x256xf32>
    %23 = math.log %22 : vector<1x256xf32>
    %24 = arith.addf %17, %23 : vector<1x256xf32>
    %25 = tpu.iota {dimensions = array<i32: 0>} : vector<8x256xi32>
    %26 = vector.broadcast %6 : vector<1x256xi32> to vector<8x256xi32>
    %27 = arith.cmpi eq, %25, %26 : vector<8x256xi32>
    %28 = arith.extui %27 : vector<8x256xi1> to vector<8x256xi32>
    %29 = arith.sitofp %28 : vector<8x256xi32> to vector<8x256xf32>
    %30 = arith.mulf %29, %4 : vector<8x256xf32>
    %cst_8 = arith.constant dense<0.000000e+00> : vector<256xf32>
    %31 = vector.multi_reduction <add>, %30, %cst_8 [0] : vector<8x256xf32> to vector<256xf32>
    %32 = vector.shape_cast %31 : vector<256xf32> to vector<1x256xf32>
    %c0_9 = arith.constant 0 : index
    %c0_10 = arith.constant 0 : index
    %33 = vector.load %arg4[%c0_9, %c0_10] : memref<8x1xf32, #tpu.memory_space<vmem>>, vector<8x1xf32>
    %34 = vector.broadcast %33 : vector<8x1xf32> to vector<8x256xf32>
    %35 = arith.mulf %29, %34 : vector<8x256xf32>
    %cst_11 = arith.constant dense<0.000000e+00> : vector<256xf32>
    %36 = vector.multi_reduction <add>, %35, %cst_11 [0] : vector<8x256xf32> to vector<256xf32>
    %37 = vector.shape_cast %36 : vector<256xf32> to vector<1x256xf32>
    %38 = arith.subf %24, %32 : vector<1x256xf32>
    %c0_12 = arith.constant 0 : index
    %c0_13 = arith.constant 0 : index
    %c0_14 = arith.constant 0 : index
    %39 = vector.load %arg5[%c0_12, %c0_13, %c0_14] : memref<1x1x256xf32, #tpu.memory_space<vmem>>, vector<1x1x256xf32>
    %40 = vector.shape_cast %39 : vector<1x1x256xf32> to vector<1x256xf32>
    %41 = arith.mulf %37, %38 : vector<1x256xf32>
    %cst_15 = arith.constant 0.000000e+00 : f32
    %42 = vector.broadcast %cst_15 : f32 to vector<1x256xf32>
    %43 = arith.select %15, %41, %42 : vector<1x256xi1>, vector<1x256xf32>
    %44 = arith.addf %40, %43 : vector<1x256xf32>
    %c0_16 = arith.constant 0 : index
    %c0_17 = arith.constant 0 : index
    %c0_18 = arith.constant 0 : index
    %45 = vector.load %arg5[%c0_16, %c0_17, %c0_18] : memref<1x1x256xf32, #tpu.memory_space<vmem>>, vector<1x1x256xf32>
    %46 = vector.shape_cast %45 : vector<1x1x256xf32> to vector<1x256xf32>
    %47 = vector.shape_cast %44 : vector<1x256xf32> to vector<1x1x256xf32>
    tpu.vector_store %arg5[%c0_16, %c0_17, %c0_18], %47 {strides = array<i32>} : memref<1x1x256xf32, #tpu.memory_space<vmem>>, vector<1x1x256xf32>,
    %c0_19 = arith.constant 0 : index
    %c0_20 = arith.constant 0 : index
    %c0_21 = arith.constant 0 : index
    %48 = vector.load %arg6[%c0_19, %c0_20, %c0_21] : memref<1x1x256xf32, #tpu.memory_space<vmem>>, vector<1x1x256xf32>
    %49 = vector.shape_cast %48 : vector<1x1x256xf32> to vector<1x256xf32>
    %cst_22 = arith.constant 0.000000e+00 : f32
    %50 = vector.broadcast %cst_22 : f32 to vector<1x256xf32>
    %51 = arith.select %15, %37, %50 : vector<1x256xi1>, vector<1x256xf32>
    %52 = arith.addf %49, %51 : vector<1x256xf32>
    %c0_23 = arith.constant 0 : index
    %c0_24 = arith.constant 0 : index
    %c0_25 = arith.constant 0 : index
    %53 = vector.load %arg6[%c0_23, %c0_24, %c0_25] : memref<1x1x256xf32, #tpu.memory_space<vmem>>, vector<1x1x256xf32>
    %54 = vector.shape_cast %53 : vector<1x1x256xf32> to vector<1x256xf32>
    %55 = vector.shape_cast %52 : vector<1x256xf32> to vector<1x1x256xf32>
    tpu.vector_store %arg6[%c0_23, %c0_24, %c0_25], %55 {strides = array<i32>} : memref<1x1x256xf32, #tpu.memory_space<vmem>>, vector<1x1x256xf32>,
    return
  }
  func.func @transform_0(%arg0: i32, %arg1: i32) -> (i32, i32, i32) {
    %c0_i32 = arith.constant 0 : i32
    %c0_i32_0 = arith.constant 0 : i32
    return %arg0, %c0_i32, %arg1 : i32, i32, i32
  }
  func.func @transform_1(%arg0: i32, %arg1: i32) -> (i32, i32, i32) {
    %c0_i32 = arith.constant 0 : i32
    %c0_i32_0 = arith.constant 0 : i32
    return %arg0, %c0_i32, %arg1 : i32, i32, i32
  }
  func.func @transform_2(%arg0: i32, %arg1: i32) -> (i32, i32) {
    %c0_i32 = arith.constant 0 : i32
    %c0_i32_0 = arith.constant 0 : i32
    %c0_i32_1 = arith.constant 0 : i32
    return %c0_i32, %c0_i32_0 : i32, i32
  }
  func.func @transform_3(%arg0: i32, %arg1: i32) -> (i32, i32, i32) {
    %c0_i32 = arith.constant 0 : i32
    %c0_i32_0 = arith.constant 0 : i32
    %c0_i32_1 = arith.constant 0 : i32
    return %arg0, %c0_i32, %c0_i32_0 : i32, i32, i32
  }
  func.func @transform_4(%arg0: i32, %arg1: i32) -> (i32, i32, i32) {
    %c0_i32 = arith.constant 0 : i32
    %c0_i32_0 = arith.constant 0 : i32
    %c0_i32_1 = arith.constant 0 : i32
    return %arg0, %c0_i32, %c0_i32_0 : i32, i32, i32
  }
}

</mosaic_0001>

<llo_original>
// kernel: _cross_entropy_loss.1
$region0: #{_cross_entropy_loss.1}
  #allocation0 [shape = 'u32[]', space=smem, size = 0x4, offset = 0x4, fixed_abs, tag = 'smem constant byte address 0x4 - core index']
  #allocation1 [shape = 'u32[144,128]{1,0:T(1,128)}', space=vmem, size = 0x12000, scoped, tag = 'internal scratch']
  %s0 = inlined_call_operand.vmem [shape: f32[2,8,256], index: 0, kind: input, shape index: {}]
  %s1 = inlined_call_operand.vmem [shape: s32[2,1,256], index: 1, kind: input, shape index: {}]
  %s2 = inlined_call_operand.vmem [shape: f32[8,1], index: 2, kind: input, shape index: {}]
  %s3 = inlined_call_operand.vmem [shape: f32[2,1,256], index: 3, kind: output, shape index: {0}]
  %s4 = inlined_call_operand.vmem [shape: f32[2,1,256], index: 4, kind: output, shape index: {1}]
  %5 = xla_tuple %s3, %s4
  %s6 = sld [smem:[#allocation0]]
  $region57: #{_cross_entropy_loss.1} parent=0
    _
  %s8 = ssub.s32 1, %s6
  %s9 = scalar_select 0, %s8, %s6
  loop: start=0, step=1, limit=4
  $region2: #{_cross_entropy_loss.1} parent=0 // loop_pre_header
    _
  $region3: #{_cross_entropy_loss.1} parent=0 // loop_header
    %s11 = sphi 0, %s15
    %p12 = scmp.ge.s32.totalorder %s11, 4
    %s18 = sphi 0, %s30
    %s19 = sphi 0, %s26
    %s20 = sphi 0, %s18
    %s21 = sphi 0, %s19
    %s22 = sphi 0, %s20
    %s23 = sphi 0, %s21
    %s35 = sphi 0, %s37
    %s38 = sphi 0, %s35
    %s39 = sphi 0, %s38
    %s55 = sphi 0, %s39
    %s63 = sphi 0, %s65
    %s66 = sphi 0, %s63
    %s67 = sphi 0, %s66
    %s83 = sphi 0, %s67
    %s87 = sphi 0, %s87
    %s89 = sphi 0, %s87
    %s90 = sphi 0, %s89
    %s104 = sphi 0, %s90
    %s110 = sphi 0, %s112
    %s113 = sphi 0, %s110
    %s114 = sphi 0, %s113
    %s130 = sphi 0, %s114
    %s136 = sphi 0, %s138
    %s139 = sphi 0, %s136
    %s140 = sphi 0, %s139
    %s156 = sphi 0, %s140
  $region4: #{_cross_entropy_loss.1} parent=0 // loop_header_branch
    %14 = sbr.rel (%p12) target = $region8
  $region5: #{_cross_entropy_loss.1} parent=0 // loop_body
    %s16 = ssub.s32 %s11, 1
    %s17 = ssub.s32 %s11, 2
    %s24 = sadd.s32 1, %s19
    %p25 = scmp.ge.s32.totalorder %s24, 1
    %s26 = scalar_select %p25, 0, %s24
    %s27 = sadd.s32 1, %s18
    %s28 = scalar_select %p25, %s27, %s18
    %p29 = scmp.ge.s32.totalorder %s28, 2
    %s30 = scalar_select %p29, 0, %s28
    %s31 = ssub.s32 %s18, %s30
    %s32 = ssub.s32 %s19, %s26
    %s33 = sor.u32 %s31, %s32
    %p34 = scmp.eq.s32.totalorder %s33, 0
    %s36 = sadd.s32 %s35, 1
    %s37 = scalar_select %p34, %s35, %s36
    %p40 = pneg %p34
    %p41 = scmp.eq.s32.totalorder %s11, 1
    %p42 = por %p40, %p41
    %p43 = scmp.ne.s32.totalorder %s35, %s38
    %p44 = scmp.eq.s32.totalorder %s11, 0
    %p45 = por %p43, %p44
    %p46 = scmp.ne.s32.totalorder %s35, %s38
    %p47 = scmp.eq.s32.totalorder %s16, 1
    %p48 = por %p46, %p47
    %p49 = scmp.ne.s32.totalorder %s38, %s39
    %p50 = scmp.eq.s32.totalorder %s16, 0
    %p51 = por %p49, %p50
    %p52 = scmp.ne.s32.totalorder %s38, %s39
    %p53 = scmp.eq.s32.totalorder %s17, 1
    %p54 = por %p52, %p53
    %p56 = scmp.ne.s32.totalorder %s39, %s55
    %p57 = scmp.eq.s32.totalorder %s17, 0
    %p58 = por %p56, %p57
    %s59 = ssub.s32 %s18, %s30
    %s60 = ssub.s32 %s19, %s26
    %s61 = sor.u32 %s59, %s60
    %p62 = scmp.eq.s32.totalorder %s61, 0
    %s64 = sadd.s32 %s63, 1
    %s65 = scalar_select %p62, %s63, %s64
    %p68 = pneg %p62
    %p69 = scmp.eq.s32.totalorder %s11, 1
    %p70 = por %p68, %p69
    %p71 = scmp.ne.s32.totalorder %s63, %s66
    %p72 = scmp.eq.s32.totalorder %s11, 0
    %p73 = por %p71, %p72
    %p74 = scmp.ne.s32.totalorder %s63, %s66
    %p75 = scmp.eq.s32.totalorder %s16, 1
    %p76 = por %p74, %p75
    %p77 = scmp.ne.s32.totalorder %s66, %s67
    %p78 = scmp.eq.s32.totalorder %s16, 0
    %p79 = por %p77, %p78
    %p80 = scmp.ne.s32.totalorder %s66, %s67
    %p81 = scmp.eq.s32.totalorder %s17, 1
    %p82 = por %p80, %p81
    %p84 = scmp.ne.s32.totalorder %s67, %s83
    %p85 = scmp.eq.s32.totalorder %s17, 0
    %p86 = por %p84, %p85
    %s88 = sadd.s32 %s87, 1
    %p91 = scmp.eq.s32.totalorder %s11, 1
    %p92 = scmp.ne.s32.totalorder %s87, %s89
    %p93 = scmp.eq.s32.totalorder %s11, 0
    %p94 = por %p92, %p93
    %p95 = scmp.ne.s32.totalorder %s87, %s89
    %p96 = scmp.eq.s32.totalorder %s16, 1
    %p97 = por %p95, %p96
    %p98 = scmp.ne.s32.totalorder %s89, %s90
    %p99 = scmp.eq.s32.totalorder %s16, 0
    %p100 = por %p98, %p99
    %p101 = scmp.ne.s32.totalorder %s89, %s90
    %p102 = scmp.eq.s32.totalorder %s17, 1
    %p103 = por %p101, %p102
    %p105 = scmp.ne.s32.totalorder %s90, %s104
    %p106 = scmp.eq.s32.totalorder %s17, 0
    %p107 = por %p105, %p106
    %s108 = ssub.s32 %s18, %s30
    %p109 = scmp.eq.s32.totalorder %s108, 0
    %s111 = sadd.s32 %s110, 1
    %s112 = scalar_select %p109, %s110, %s111
    %p115 = pneg %p109
    %p116 = scmp.eq.s32.totalorder %s11, 1
    %p117 = por %p115, %p116
    %p118 = scmp.ne.s32.totalorder %s110, %s113
    %p119 = scmp.eq.s32.totalorder %s11, 0
    %p120 = por %p118, %p119
    %p121 = scmp.ne.s32.totalorder %s110, %s113
    %p122 = scmp.eq.s32.totalorder %s16, 1
    %p123 = por %p121, %p122
    %p124 = scmp.ne.s32.totalorder %s113, %s114
    %p125 = scmp.eq.s32.totalorder %s16, 0
    %p126 = por %p124, %p125
    %p127 = scmp.ne.s32.totalorder %s113, %s114
    %p128 = scmp.eq.s32.totalorder %s17, 1
    %p129 = por %p127, %p128
    %p131 = scmp.ne.s32.totalorder %s114, %s130
    %p132 = scmp.eq.s32.totalorder %s17, 0
    %p133 = por %p131, %p132
    %s134 = ssub.s32 %s18, %s30
    %p135 = scmp.eq.s32.totalorder %s134, 0
    %s137 = sadd.s32 %s136, 1
    %s138 = scalar_select %p135, %s136, %s137
    %p141 = pneg %p135
    %p142 = scmp.eq.s32.totalorder %s11, 1
    %p143 = por %p141, %p142
    %p144 = scmp.ne.s32.totalorder %s136, %s139
    %p145 = scmp.eq.s32.totalorder %s11, 0
    %p146 = por %p144, %p145
    %p147 = scmp.ne.s32.totalorder %s136, %s139
    %p148 = scmp.eq.s32.totalorder %s16, 1
    %p149 = por %p147, %p148
    %p150 = scmp.ne.s32.totalorder %s139, %s140
    %p151 = scmp.eq.s32.totalorder %s16, 0
    %p152 = por %p150, %p151
    %p153 = scmp.ne.s32.totalorder %s139, %s140
    %p154 = scmp.eq.s32.totalorder %s17, 1
    %p155 = por %p153, %p154
    %p157 = scmp.ne.s32.totalorder %s140, %s156
    %p158 = scmp.eq.s32.totalorder %s17, 0
    %p159 = por %p157, %p158
    %p160 = scmp.le.s32.totalorder 1, %s11
    %p161 = scmp.lt.s32.totalorder %s11, 3
    %p162 = pnand %p160, %p161
    %p163 = pneg %p162
    // Predicated region
    $region9: #{_cross_entropy_loss.1} parent=5 // pred_check
      _
    $region10: #{_cross_entropy_loss.1} parent=5 // pred_check_branch
      %165 = sbr.rel (%p162) target = $region12
    $region11: #{_cross_entropy_loss.1} parent=5 // pred_region
      %s166 = ssub.s32 %s11, 1
      // Predicated region
      $region13: #{_cross_entropy_loss.1} parent=11 // pred_check
        %p167 = pneg %p100
      $region14: #{_cross_entropy_loss.1} parent=11 // pred_check_branch
        %169 = sbr.rel (%p167) target = $region16
      $region15: #{_cross_entropy_loss.1} parent=11 // pred_region
        _
      $region16: #{_cross_entropy_loss.1} parent=11 // pred_fallthru
        _
    $region12: #{_cross_entropy_loss.1} parent=5 // pred_fallthru
      _
    %p170 = scmp.lt.s32.totalorder %s11, 2
    // Predicated region
    $region17: #{_cross_entropy_loss.1} parent=5 // pred_check
      %p171 = pneg %p170
    $region18: #{_cross_entropy_loss.1} parent=5 // pred_check_branch
      %173 = sbr.rel (%p171) target = $region20
    $region19: #{_cross_entropy_loss.1} parent=5 // pred_region
      // Predicated region
      $region21: #{_cross_entropy_loss.1} parent=19 // pred_check
        %p174 = pneg %p45
      $region22: #{_cross_entropy_loss.1} parent=19 // pred_check_branch
        %176 = sbr.rel (%p174) target = $region24
      $region23: #{_cross_entropy_loss.1} parent=19 // pred_region
        %s177 = smul.u32 2, %s19
        %p178 = scmp.lt.s32.totalorder %s18, 1
        %s179 = scalar_select %p178, %s18, 1
        %p180 = scmp.lt.s32.totalorder %s177, 1
        %s181 = scalar_select %p180, %s177, 1
        %s182 = smul.addr %s179, 2
        %s183 = sadd.s32 %s181, %s182
        %s184 = smul.addr %s183, 8
        %s185 = scalar_lea.vmem %s0, %s184
        %s186 = smul.u32 2, %s19
      $region24: #{_cross_entropy_loss.1} parent=19 // pred_fallthru
        _
      // Predicated region
      $region25: #{_cross_entropy_loss.1} parent=19 // pred_check
        %p187 = pneg %p73
      $region26: #{_cross_entropy_loss.1} parent=19 // pred_check_branch
        %189 = sbr.rel (%p187) target = $region28
      $region27: #{_cross_entropy_loss.1} parent=19 // pred_region
        %s190 = smul.u32 2, %s19
        %p191 = scmp.lt.s32.totalorder %s18, 1
        %s192 = scalar_select %p191, %s18, 1
        %p193 = scmp.lt.s32.totalorder %s190, 1
        %s194 = scalar_select %p193, %s190, 1
        %s195 = smul.addr %s192, 2
        %s196 = sadd.s32 %s194, %s195
        %s197 = scalar_lea.vmem %s1, %s196
        %s198 = smul.u32 2, %s19
      $region28: #{_cross_entropy_loss.1} parent=19 // pred_fallthru
        _
    $region20: #{_cross_entropy_loss.1} parent=5 // pred_fallthru
      _
    %p199 = scmp.le.s32.totalorder 1, %s11
    %p200 = scmp.lt.s32.totalorder %s11, 3
    %p201 = pnand %p199, %p200
    %p202 = pneg %p201
    // Predicated region
    $region29: #{_cross_entropy_loss.1} parent=5 // pred_check
      _
    $region30: #{_cross_entropy_loss.1} parent=5 // pred_check_branch
      %204 = sbr.rel (%p201) target = $region32
    $region31: #{_cross_entropy_loss.1} parent=5 // pred_region
      %s205 = ssub.s32 %s11, 1
      %s206 = smul.u32 2, %s21
      %p207 = scmp.lt.s32.totalorder %s20, 1
      %s208 = scalar_select %p207, %s20, 1
      %p209 = scmp.lt.s32.totalorder %s206, 1
      %s210 = scalar_select %p209, %s206, 1
      %s211 = smul.addr %s208, 2
      %s212 = sadd.s32 %s210, %s211
      %s213 = smul.addr %s212, 8
      %s214 = scalar_lea.vmem %s0, %s213
      %p215 = pneg %p51
      %p216 = pneg %p48
      %s217 = smul.u32 2, %s21
      %p218 = scmp.lt.s32.totalorder %s20, 1
      %s219 = scalar_select %p218, %s20, 1
      %p220 = scmp.lt.s32.totalorder %s217, 1
      %s221 = scalar_select %p220, %s217, 1
      %s222 = smul.addr %s219, 2
      %s223 = sadd.s32 %s221, %s222
      %s224 = scalar_lea.vmem %s1, %s223
      %p225 = pneg %p79
      %p226 = pneg %p76
      %p227 = pneg %p100
      %p228 = pneg %p97
      %p229 = pneg %p126
      %p230 = pneg %p123
      %p231 = scmp.lt.s32.totalorder %s20, 1
      %s232 = scalar_select %p231, %s20, 1
      %s233 = smul.addr %s232, 2
      %s234 = scalar_lea.vmem %s3, %s233
      %p235 = pneg %p152
      %p236 = pneg %p149
      %p237 = scmp.lt.s32.totalorder %s20, 1
      %s238 = scalar_select %p237, %s20, 1
      %s239 = smul.addr %s238, 2
      %s240 = scalar_lea.vmem %s4, %s239
      %s241 = smul.u32 2, %s21
      %p242 = scmp.lt.s32.totalorder %s20, 1
      %s243 = scalar_select %p242, %s20, 1
      %p244 = scmp.lt.s32.totalorder %s241, 1
      %s245 = scalar_select %p244, %s241, 1
      %s246 = smul.addr %s243, 2
      %s247 = sadd.s32 %s245, %s246
      %s248 = smul.addr %s247, 8
      %s249 = scalar_lea.vmem %s0, %s248
      %s250 = smul.u32 2, %s21
      %s251 = smul.u32 2, %s21
      %p252 = scmp.lt.s32.totalorder %s20, 1
      %s253 = scalar_select %p252, %s20, 1
      %p254 = scmp.lt.s32.totalorder %s251, 1
      %s255 = scalar_select %p254, %s251, 1
      %s256 = smul.addr %s253, 2
      %s257 = sadd.s32 %s255, %s256
      %s258 = scalar_lea.vmem %s1, %s257
      %s259 = smul.u32 2, %s21
      %p260 = scmp.lt.s32.totalorder %s20, 1
      %s261 = scalar_select %p260, %s20, 1
      %s262 = smul.addr %s261, 2
      %s263 = scalar_lea.vmem %s3, %s262
      %p264 = scmp.lt.s32.totalorder %s20, 1
      %s265 = scalar_select %p264, %s20, 1
      %s266 = smul.addr %s265, 2
      %s267 = scalar_lea.vmem %s4, %s266
      %p268 = scmp.eq.s32.totalorder %s21, 0
      // Predicated region
      $region33: #{_cross_entropy_loss.1} parent=31 // pred_check
        %p269 = pneg %p268
      $region34: #{_cross_entropy_loss.1} parent=31 // pred_check_branch
        %271 = sbr.rel (%p269) target = $region36
      $region35: #{_cross_entropy_loss.1} parent=31 // pred_region
        %v272 = vlaneseq
        %vm273 = vcmp.ge.s32.totalorder %v272, 0
        %vm274 = vcmp.lt.s32.totalorder %v272, 256
        %vm275 = vmand %vm273, %vm274
        %276 = vst.msk [vmem:[%s263] sm:$0x3] %vm275, 0.0
        %277 = vst.msk [vmem:[%s267] sm:$0x3] %vm275, 0.0
      $region36: #{_cross_entropy_loss.1} parent=31 // pred_fallthru
        _
      %v278 = vld [vmem:[%s249] sm:$0xff]
      %v279 = vld [vmem:[%s249 + $0x8] sm:$0xff]
      %v280 = vld [vmem:[%s258] sm:$0x3]
      %s281 = smul.u32 %s21, 256
      %v282 = vlaneseq
      %v283 = vand.u32 %v282, 127
      %v284 = vadd.s32 %v283, 128
      %v285 = vstv %s281
      %v286 = vadd.s32 %v285, %v283
      %v287 = vadd.s32 %v285, %v284
      %vm288 = vcmp.lt.s32.totalorder %v286, 256
      %vm289 = vcmp.lt.s32.totalorder %v287, 256
      %vm290 = vcmp.ne.s32.totalorder %v280, 255
      %v291 = vsel %vm290, 1, 0
      %v292 = vlaneseq
      %v293 = vshrl.u32 %v292, 7
      %v294 = vsub.s32 0, %v293
      %v295 = vrot.slane %v291, %v294
      %v296 = vlaneseq
      %v297 = vshrl.u32 %v296, 7
      %v298 = vsub.s32 1, %v297
      %v299 = vrot.slane %v291, %v298
      %vm300 = vcmp.ne.s32.totalorder %v295, 0
      %vm301 = vcmp.ne.s32.totalorder %v299, 0
      %vm302 = vmand %vm288, %vm300
      %vm303 = vmand %vm289, %vm301
      %v304 = vrot.slane %v278, 4
      %v305 = vmax.f32 %v278, %v304
      %v306 = vrot.slane %v305, 2
      %v307 = vmax.f32 %v305, %v306
      %v308 = vrot.slane %v307, 1
      %v309 = vmax.f32 %v307, %v308
      %v310 = vrot.slane %v279, 4
      %v311 = vmax.f32 %v279, %v310
      %v312 = vrot.slane %v311, 2
      %v313 = vmax.f32 %v311, %v312
      %v314 = vrot.slane %v313, 1
      %v315 = vmax.f32 %v313, %v314
      %v316 = vsub.f32 %v278, %v309
      %v317 = vsub.f32 %v279, %v315
      %v318 = vmul.f32 %v316, 1.442695
      %v319 = vpow.pop %v318
      %v320 = vmul.f32 %v317, 1.442695
      %v321 = vpow.pop %v320
      %v322 = vrot.slane %v319, 4
      %v323 = vadd.f32 %v319, %v322
      %v324 = vrot.slane %v323, 2
      %v325 = vadd.f32 %v323, %v324
      %v326 = vrot.slane %v325, 1
      %v327 = vadd.f32 %v325, %v326
      %v328 = vrot.slane %v321, 4
      %v329 = vadd.f32 %v321, %v328
      %v330 = vrot.slane %v329, 2
      %v331 = vadd.f32 %v329, %v330
      %v332 = vrot.slane %v331, 1
      %v333 = vadd.f32 %v331, %v332
      %v334 = vlog2.pop %v327
      %v335 = vmul.f32 %v334, 0.6931472
      %v336 = vlog2.pop %v333
      %v337 = vmul.f32 %v336, 0.6931472
      %v338 = vadd.f32 %v309, %v335
      %v339 = vadd.f32 %v315, %v337
      %v340 = vlaneseq
      %v341 = vshrl.u32 %v340, 7
      %v342 = vlaneseq
      %v343 = vshrl.u32 %v342, 7
      %v344 = vsub.s32 0, %v343
      %v345 = vrot.slane %v280, %v344
      %v346 = vlaneseq
      %v347 = vshrl.u32 %v346, 7
      %v348 = vsub.s32 1, %v347
      %v349 = vrot.slane %v280, %v348
      %vm350 = vcmp.eq.s32.totalorder %v341, %v345
      %vm351 = vcmp.eq.s32.totalorder %v341, %v349
      %v352 = vsel %vm350, 1, 0
      %v353 = vsel %vm351, 1, 0
      %v354 = vcvt.s32.f32 %v352
      %v355 = vcvt.s32.f32 %v353
      %v356 = vmul.f32 %v354, %v278
      %v357 = vmul.f32 %v355, %v279
      %v358 = vrot.slane %v356, 4
      %v359 = vadd.f32 %v356, %v358
      %v360 = vrot.slane %v359, 2
      %v361 = vadd.f32 %v359, %v360
      %v362 = vrot.slane %v361, 1
      %v363 = vadd.f32 %v361, %v362
      %v364 = vrot.slane %v357, 4
      %v365 = vadd.f32 %v357, %v364
      %v366 = vrot.slane %v365, 2
      %v367 = vadd.f32 %v365, %v366
      %v368 = vrot.slane %v367, 1
      %v369 = vadd.f32 %v367, %v368
      %v370 = vld [vmem:[%s2] sm:$0xff]
      %372 = vset.pattern.permute.xlu0 0
      %373 = vperm.xlu0 %372, %v370
      %v374 = vpop.permute.xlu0 %373
      %v376 = vmul.f32 %v354, %v374
      %v377 = vmul.f32 %v355, %v374
      %v378 = vrot.slane %v376, 4
      %v379 = vadd.f32 %v376, %v378
      %v380 = vrot.slane %v379, 2
      %v381 = vadd.f32 %v379, %v380
      %v382 = vrot.slane %v381, 1
      %v383 = vadd.f32 %v381, %v382
      %v384 = vrot.slane %v377, 4
      %v385 = vadd.f32 %v377, %v384
      %v386 = vrot.slane %v385, 2
      %v387 = vadd.f32 %v385, %v386
      %v388 = vrot.slane %v387, 1
      %v389 = vadd.f32 %v387, %v388
      %v390 = vsub.f32 %v338, %v363
      %v391 = vsub.f32 %v339, %v369
      %v392 = vld [vmem:[%s263] sm:$0x3]
      %v393 = vmul.f32 %v383, %v390
      %v394 = vmul.f32 %v389, %v391
      %v395 = vsel %vm302, %v393, 0.0
      %v396 = vsel %vm303, %v394, 0.0
      %v399 = vcombine.low %v395, %v396
      %v401 = vunpack.c.l.s4 1966171168
      %v402 = vunpack.c.0.s8 %v401
      %v403 = vlaneseq
      %v404 = vshrl.u32 %v403, 7
      %v405 = vsub.s32 %v402, %v404
      %v406 = vrot.slane %v399, %v405
      %v408 = vunpack.c.l.s4 1966171168
      %v409 = vunpack.c.0.s8 %v408
      %v410 = vlaneseq
      %v411 = vshrl.u32 %v410, 7
      %v412 = vsub.s32 %v409, %v411
      %v413 = vrot.slane %v406, %v412
      %v415 = vadd.f32 %v392, %v413
      %v416 = vlaneseq
      %vm417 = vcmp.ge.s32.totalorder %v416, 0
      %vm418 = vcmp.lt.s32.totalorder %v416, 256
      %vm419 = vmand %vm417, %vm418
      %420 = vst.msk [vmem:[%s263] sm:$0x3] %vm419, %v415
      %v421 = vld [vmem:[%s267] sm:$0x3]
      %v422 = vsel %vm302, %v383, 0.0
      %v423 = vsel %vm303, %v389, 0.0
      %v426 = vcombine.low %v422, %v423
      %v428 = vunpack.c.l.s4 1966171168
      %v429 = vunpack.c.0.s8 %v428
      %v430 = vlaneseq
      %v431 = vshrl.u32 %v430, 7
      %v432 = vsub.s32 %v429, %v431
      %v433 = vrot.slane %v426, %v432
      %v435 = vunpack.c.l.s4 1966171168
      %v436 = vunpack.c.0.s8 %v435
      %v437 = vlaneseq
      %v438 = vshrl.u32 %v437, 7
      %v439 = vsub.s32 %v436, %v438
      %v440 = vrot.slane %v433, %v439
      %v442 = vadd.f32 %v421, %v440
      %443 = vst.msk [vmem:[%s267] sm:$0x3] %vm419, %v442
      %p444 = scmp.lt.s32.totalorder %s20, 1
      %s445 = scalar_select %p444, %s20, 1
      %s446 = smul.addr %s445, 2
      %s447 = scalar_lea.vmem %s3, %s446
      %p448 = scmp.lt.s32.totalorder %s20, 1
      %s449 = scalar_select %p448, %s20, 1
      %s450 = smul.addr %s449, 2
      %s451 = scalar_lea.vmem %s4, %s450
      // Predicated region
      $region37: #{_cross_entropy_loss.1} parent=31 // pred_check
        %p452 = pneg %p123
      $region38: #{_cross_entropy_loss.1} parent=31 // pred_check_branch
        %454 = sbr.rel (%p452) target = $region40
      $region39: #{_cross_entropy_loss.1} parent=31 // pred_region
        _
      $region40: #{_cross_entropy_loss.1} parent=31 // pred_fallthru
        _
      // Predicated region
      $region41: #{_cross_entropy_loss.1} parent=31 // pred_check
        %p455 = pneg %p149
      $region42: #{_cross_entropy_loss.1} parent=31 // pred_check_branch
        %457 = sbr.rel (%p455) target = $region44
      $region43: #{_cross_entropy_loss.1} parent=31 // pred_region
        _
      $region44: #{_cross_entropy_loss.1} parent=31 // pred_fallthru
        _
    $region32: #{_cross_entropy_loss.1} parent=5 // pred_fallthru
      _
    %p458 = scmp.le.s32.totalorder 2, %s11
    // Predicated region
    $region45: #{_cross_entropy_loss.1} parent=5 // pred_check
      %p459 = pneg %p458
    $region46: #{_cross_entropy_loss.1} parent=5 // pred_check_branch
      %461 = sbr.rel (%p459) target = $region48
    $region47: #{_cross_entropy_loss.1} parent=5 // pred_region
      %s462 = ssub.s32 %s11, 2
      // Predicated region
      $region49: #{_cross_entropy_loss.1} parent=47 // pred_check
        %p463 = pneg %p129
      $region50: #{_cross_entropy_loss.1} parent=47 // pred_check_branch
        %465 = sbr.rel (%p463) target = $region52
      $region51: #{_cross_entropy_loss.1} parent=47 // pred_region
        %p466 = scmp.lt.s32.totalorder %s22, 1
        %s467 = scalar_select %p466, %s22, 1
        %s468 = smul.addr %s467, 2
        %s469 = scalar_lea.vmem %s3, %s468
      $region52: #{_cross_entropy_loss.1} parent=47 // pred_fallthru
        _
      // Predicated region
      $region53: #{_cross_entropy_loss.1} parent=47 // pred_check
        %p470 = pneg %p155
      $region54: #{_cross_entropy_loss.1} parent=47 // pred_check_branch
        %472 = sbr.rel (%p470) target = $region56
      $region55: #{_cross_entropy_loss.1} parent=47 // pred_region
        %p473 = scmp.lt.s32.totalorder %s22, 1
        %s474 = scalar_select %p473, %s22, 1
        %s475 = smul.addr %s474, 2
        %s476 = scalar_lea.vmem %s4, %s475
      $region56: #{_cross_entropy_loss.1} parent=47 // pred_fallthru
        _
    $region48: #{_cross_entropy_loss.1} parent=5 // pred_fallthru
      _
  $region6: #{_cross_entropy_loss.1} parent=0 // loop_footer
    %s15 = sadd.s32 1, %s11
  $region7: #{_cross_entropy_loss.1} parent=0 // loop_footer_branch
    %10 = sbr.rel target = $region3
  $region8: #{_cross_entropy_loss.1} parent=0 // loop_exit
    _

</llo_original>
